<compile_context>
chip_gen: v7x
topology: tpu7x:2x2x1
jax: 0.10.0
libtpu: 0.0.40
codegen_flags: <defaults>
</compile_context>

<pallas_src>
import functools

import jax
import jax.numpy as jnp
from jax.experimental import pallas as pl
from jax.experimental.pallas import tpu as pltpu

IN_SIZE = 21
HIDDEN = [64, 32, 16]
BN_EPS = 1e-5
PRELU_INIT = 0.25  # nn.PReLU() default


# --------------------------------------------------------------------------- #
# Kernel
# --------------------------------------------------------------------------- #
def _mlp_kernel(x_ref,
                w1_ref, b1_ref,
                w2_ref, b2_ref,
                w3_ref, b3_ref,
                w4_ref,
                scal_ref,
                o_ref):
    """Fused eval-mode MLP forward for one batch tile.

    x_ref  : (T, 21)  VMEM   natural-layout input tile (batch-major)
    wK_ref : (out,in) VMEM   Linear weight with eval-mode BN folded in
    bK_ref : (out,1)  VMEM   folded bias
    w4_ref : (1, 16)  VMEM   final Linear weight
    scal   : (4,)     SMEM   [prelu1, prelu2, prelu3, final_bias]
    o_ref  : (1, T)   VMEM   lane-dense output tile
    """
    x = x_ref[...].astype(jnp.float32)                          # (T, 21)

    # Layer 1: contract the feature axis of both operands -> (64, T).
    # Puts the batch on the lane axis without any wrapper-side transpose.
    z = jax.lax.dot_general(
        w1_ref[...], x,
        dimension_numbers=(((1,), (1,)), ((), ())),
        preferred_element_type=jnp.float32) + b1_ref[...]
    h = jnp.where(z > 0, z, scal_ref[0] * z)                    # PReLU

    def hidden(h, w_r, b_r, slope):
        z = jnp.dot(w_r[...], h, preferred_element_type=jnp.float32) + b_r[...]
        # PReLU (Dropout is identity in eval mode).
        return jnp.where(z > 0, z, slope * z)

    h = hidden(h, w2_ref, b2_ref, scal_ref[1])                  # (32, T)
    h = hidden(h, w3_ref, b3_ref, scal_ref[2])                  # (16, T)

    # Final 16 -> 1 Linear; N = T so it stays on the MXU and the store is a
    # full-lane (1, T) write.
    o_ref[...] = (jnp.dot(w4_ref[...], h, preferred_element_type=jnp.float32)
                  + scal_ref[3])


def _replicated_spec(shape):
    nd = len(shape)
    return pl.BlockSpec(shape, lambda i, _nd=nd: (0,) * _nd)


# --------------------------------------------------------------------------- #
# Wrapper
# --------------------------------------------------------------------------- #
@functools.partial(jax.jit, static_argnames=("batch_tile",))
def diabetes_network_forward(x, kernel_params, *, batch_tile=1024):
    """x: [B, 21] float -> [B, 1] float32 (eval-mode forward)."""
    w1, b1, w2, b2, w3, b3, w4, scalars = kernel_params
    B, F = x.shape
    assert F == IN_SIZE

    # Clamp the tile to the (128-rounded) batch so tiny batches don't pad to a
    # huge tile; keep the lane dimension a multiple of 128.
    batch_tile = min(batch_tile, ((B + 127) // 128) * 128)
    assert batch_tile % 128 == 0

    grid_b = pl.cdiv(B, batch_tile)
    b_pad = grid_b * batch_tile

    xp = jnp.asarray(x, jnp.float32)                # (B, 21): natural layout
    if b_pad != B:
        xp = jnp.pad(xp, ((0, b_pad - B), (0, 0)))

    vmem_params = (w1, b1, w2, b2, w3, b3, w4)
    in_specs = [pl.BlockSpec((batch_tile, IN_SIZE), lambda i: (i, 0))]
    in_specs += [_replicated_spec(p.shape) for p in vmem_params]
    # Scalars (PReLU slopes + final bias) live in SMEM — no VMEM tiles.
    in_specs += [pl.BlockSpec(memory_space=pltpu.MemorySpace.SMEM)]

    out = pl.pallas_call(
        _mlp_kernel,
        out_shape=jax.ShapeDtypeStruct((1, b_pad), jnp.float32),
        grid_spec=pltpu.PrefetchScalarGridSpec(
            num_scalar_prefetch=0,
            grid=(grid_b,),
            in_specs=in_specs,
            out_specs=pl.BlockSpec((1, batch_tile), lambda i: (0, i)),
        ),
        compiler_params=pltpu.CompilerParams(
            dimension_semantics=("parallel",)),
    )(xp, w1, b1, w2, b2, w3, b3, w4, scalars)

    return out[0, :B].reshape(B, 1)


# --------------------------------------------------------------------------- #
# Parameters (PyTorch-style) + BN/bias folding
# --------------------------------------------------------------------------- #
def init_params(key):
    """PyTorch-style parameters for DiabetesNetwork (eval mode).

    Linear weights use kaiming_normal_(fan_in, relu).  Biases, BatchNorm
    affine params / running statistics and PReLU slopes get small non-trivial
    values so the BN-fold path is genuinely exercised; the forward math is
    identical to the nn.Module."""
    sizes = [IN_SIZE] + HIDDEN
    prelu_slopes = (PRELU_INIT, 0.2, 0.15)
    hidden = []
    for li, (fan_in, fan_out) in enumerate(zip(sizes[:-1], sizes[1:])):
        key, *ks = jax.random.split(key, 7)
        std = (2.0 / fan_in) ** 0.5
        W = std * jax.random.normal(ks[0], (fan_out, fan_in), jnp.float32)
        b = 0.05 * jax.random.normal(ks[1], (fan_out,), jnp.float32)
        gamma = 1.0 + 0.1 * jax.random.normal(ks[2], (fan_out,), jnp.float32)
        beta = 0.1 * jax.random.normal(ks[3], (fan_out,), jnp.float32)
        mean = 0.1 * jax.random.normal(ks[4], (fan_out,), jnp.float32)
        var = 1.0 + 0.1 * jnp.abs(jax.random.normal(ks[5], (fan_out,), jnp.float32))
        a = jnp.float32(prelu_slopes[li])
        hidden.append((W, b, gamma, beta, mean, var, a))
    key, kw, kb = jax.random.split(key, 3)
    std = (2.0 / HIDDEN[-1]) ** 0.5
    W4 = std * jax.random.normal(kw, (1, HIDDEN[-1]), jnp.float32)
    b4 = 0.05 * jax.random.normal(kb, (1,), jnp.float32)
    return {"hidden": hidden, "final": (W4, b4)}


def fold_params(raw):
    """Fold eval-mode BatchNorm1d (and the Linear bias) into the Linear
    weights, packed in the [out, in] layout the kernel expects.  The PReLU
    slopes and the final bias are packed into one (4,) SMEM scalar array."""
    packed = []
    slopes = []
    for (W, b, gamma, beta, mean, var, a) in raw["hidden"]:
        s = gamma / jnp.sqrt(var + BN_EPS)                         # (out,)
        t = beta - mean * s                                        # (out,)
        packed.append((W * s[:, None]).astype(jnp.float32))        # (out, in)
        packed.append(((b * s + t)[:, None]).astype(jnp.float32))  # (out, 1)
        slopes.append(a)
    W4, b4 = raw["final"]
    packed.append(W4.astype(jnp.float32))                          # (1, 16)
    scalars = jnp.concatenate([jnp.stack(slopes).astype(jnp.float32),
                               b4.astype(jnp.float32)])            # (4,) -> SMEM
    packed.append(scalars)
    return tuple(packed)


# --------------------------------------------------------------------------- #
# Pure-JAX reference (eval-mode forward, unfolded params)
# --------------------------------------------------------------------------- #
def reference_forward(x, raw):
    h = jnp.asarray(x, jnp.float32)
    for (W, b, gamma, beta, mean, var, a) in raw["hidden"]:
        z = jnp.dot(h, W.T, precision=jax.lax.Precision.HIGHEST) + b
        z = (z - mean) / jnp.sqrt(var + BN_EPS) * gamma + beta
        h = jnp.where(z > 0, z, a * z)        # PReLU; Dropout identity (eval)
    W4, b4 = raw["final"]
    return jnp.dot(h, W4.T, precision=jax.lax.Precision.HIGHEST) + b4


if __name__ == "__main__":
    key = jax.random.PRNGKey(0)
    k_param, k_x = jax.random.split(key)

    B = 300  # deliberately not a multiple of the tile (exercises pad + 3-step grid)
    x = jax.random.normal(k_x, (B, IN_SIZE), jnp.float32)

    raw = init_params(k_param)
    kparams = fold_params(raw)

    out = diabetes_network_forward(x, kparams, batch_tile=128)
    out = jax.block_until_ready(out)
    assert out.shape == (B, 1)

    ref = reference_forward(x, raw)
    err = float(jnp.max(jnp.abs(out - ref)))
    assert jnp.allclose(out, ref, atol=1e-3, rtol=1e-3), (
        f"mismatch vs reference (max abs err {err})")

    print("KERNEL_OK")
</pallas_src>

<mosaic_0001>
module attributes {stable_mosaic.version = 11 : i64} {
  func.func @_mlp_kernel(%arg0: i32, %arg1: memref<128x21xf32, #tpu.memory_space<vmem>>, %arg2: memref<64x21xf32, #tpu.memory_space<vmem>>, %arg3: memref<64x1xf32, #tpu.memory_space<vmem>>, %arg4: memref<32x64xf32, #tpu.memory_space<vmem>>, %arg5: memref<32x1xf32, #tpu.memory_space<vmem>>, %arg6: memref<16x32xf32, #tpu.memory_space<vmem>>, %arg7: memref<16x1xf32, #tpu.memory_space<vmem>>, %arg8: memref<1x16xf32, #tpu.memory_space<vmem>>, %arg9: memref<4xf32, #tpu.memory_space<smem>>, %arg10: memref<1x128xf32, #tpu.memory_space<vmem>>) attributes {dimension_semantics = [#tpu.dimension_semantics<parallel>], iteration_bounds = array<i64: 3>, scalar_prefetch = 0 : i64, scratch_operands = 0 : i64, tpu.core_type = #tpu.core_type<tc>, window_params = [{transform_indices = @transform_0, window_bounds = array<i64: 128, 21>}, {pipeline_mode = #tpu.pipeline_mode<synchronous>, transform_indices = @transform_1, window_bounds = array<i64: 64, 21>}, {pipeline_mode = #tpu.pipeline_mode<synchronous>, transform_indices = @transform_2, window_bounds = array<i64: 64, 1>}, {pipeline_mode = #tpu.pipeline_mode<synchronous>, transform_indices = @transform_3, window_bounds = array<i64: 32, 64>}, {pipeline_mode = #tpu.pipeline_mode<synchronous>, transform_indices = @transform_4, window_bounds = array<i64: 32, 1>}, {pipeline_mode = #tpu.pipeline_mode<synchronous>, transform_indices = @transform_5, window_bounds = array<i64: 16, 32>}, {pipeline_mode = #tpu.pipeline_mode<synchronous>, transform_indices = @transform_6, window_bounds = array<i64: 16, 1>}, {pipeline_mode = #tpu.pipeline_mode<synchronous>, transform_indices = @transform_7, window_bounds = array<i64: 1, 16>}, {transform_indices = @transform_8, window_bounds = array<i64: 4>}, {transform_indices = @transform_9, window_bounds = array<i64: 1, 128>}]} {
    %c0 = arith.constant 0 : index
    %c0_0 = arith.constant 0 : index
    %0 = vector.load %arg1[%c0, %c0_0] : memref<128x21xf32, #tpu.memory_space<vmem>>, vector<128x21xf32>
    %c0_1 = arith.constant 0 : index
    %c0_2 = arith.constant 0 : index
    %1 = vector.load %arg2[%c0_1, %c0_2] : memref<64x21xf32, #tpu.memory_space<vmem>>, vector<64x21xf32>
    %cst = arith.constant dense<0.000000e+00> : vector<64x128xf32>
    %2 = tpu.matmul %1, %0, %cst {dimension_numbers = #tpu.dot_dimension_numbers<[1], [1], [0], [0], [0, 0, 1, 0], [], []>} : vector<64x21xf32>, vector<128x21xf32>, vector<64x128xf32> -> vector<64x128xf32>
    %c0_3 = arith.constant 0 : index
    %c0_4 = arith.constant 0 : index
    %3 = vector.load %arg3[%c0_3, %c0_4] : memref<64x1xf32, #tpu.memory_space<vmem>>, vector<64x1xf32>
    %4 = vector.broadcast %3 : vector<64x1xf32> to vector<64x128xf32>
    %5 = arith.addf %2, %4 : vector<64x128xf32>
    %cst_5 = arith.constant 0.000000e+00 : f32
    %6 = vector.broadcast %cst_5 : f32 to vector<64x128xf32>
    %7 = arith.cmpf ogt, %5, %6 : vector<64x128xf32>
    %c0_6 = arith.constant 0 : index
    %8 = memref.load %arg9[%c0_6] : memref<4xf32, #tpu.memory_space<smem>>
    %9 = vector.broadcast %8 : f32 to vector<64x128xf32>
    %10 = arith.mulf %9, %5 : vector<64x128xf32>
    %11 = arith.select %7, %5, %10 : vector<64x128xi1>, vector<64x128xf32>
    %c1 = arith.constant 1 : index
    %12 = memref.load %arg9[%c1] : memref<4xf32, #tpu.memory_space<smem>>
    %c0_7 = arith.constant 0 : index
    %c0_8 = arith.constant 0 : index
    %13 = vector.load %arg4[%c0_7, %c0_8] : memref<32x64xf32, #tpu.memory_space<vmem>>, vector<32x64xf32>
    %cst_9 = arith.constant dense<0.000000e+00> : vector<32x128xf32>
    %14 = tpu.matmul %13, %11, %cst_9 {dimension_numbers = #tpu.dot_dimension_numbers<[1], [0], [0], [1], [0, 0, 1, 1], [], []>} : vector<32x64xf32>, vector<64x128xf32>, vector<32x128xf32> -> vector<32x128xf32>
    %c0_10 = arith.constant 0 : index
    %c0_11 = arith.constant 0 : index
    %15 = vector.load %arg5[%c0_10, %c0_11] : memref<32x1xf32, #tpu.memory_space<vmem>>, vector<32x1xf32>
    %16 = vector.broadcast %15 : vector<32x1xf32> to vector<32x128xf32>
    %17 = arith.addf %14, %16 : vector<32x128xf32>
    %cst_12 = arith.constant 0.000000e+00 : f32
    %18 = vector.broadcast %cst_12 : f32 to vector<32x128xf32>
    %19 = arith.cmpf ogt, %17, %18 : vector<32x128xf32>
    %20 = vector.broadcast %12 : f32 to vector<32x128xf32>
    %21 = arith.mulf %20, %17 : vector<32x128xf32>
    %22 = arith.select %19, %17, %21 : vector<32x128xi1>, vector<32x128xf32>
    %c2 = arith.constant 2 : index
    %23 = memref.load %arg9[%c2] : memref<4xf32, #tpu.memory_space<smem>>
    %c0_13 = arith.constant 0 : index
    %c0_14 = arith.constant 0 : index
    %24 = vector.load %arg6[%c0_13, %c0_14] : memref<16x32xf32, #tpu.memory_space<vmem>>, vector<16x32xf32>
    %cst_15 = arith.constant dense<0.000000e+00> : vector<16x128xf32>
    %25 = tpu.matmul %24, %22, %cst_15 {dimension_numbers = #tpu.dot_dimension_numbers<[1], [0], [0], [1], [0, 0, 1, 1], [], []>} : vector<16x32xf32>, vector<32x128xf32>, vector<16x128xf32> -> vector<16x128xf32>
    %c0_16 = arith.constant 0 : index
    %c0_17 = arith.constant 0 : index
    %26 = vector.load %arg7[%c0_16, %c0_17] : memref<16x1xf32, #tpu.memory_space<vmem>>, vector<16x1xf32>
    %27 = vector.broadcast %26 : vector<16x1xf32> to vector<16x128xf32>
    %28 = arith.addf %25, %27 : vector<16x128xf32>
    %cst_18 = arith.constant 0.000000e+00 : f32
    %29 = vector.broadcast %cst_18 : f32 to vector<16x128xf32>
    %30 = arith.cmpf ogt, %28, %29 : vector<16x128xf32>
    %31 = vector.broadcast %23 : f32 to vector<16x128xf32>
    %32 = arith.mulf %31, %28 : vector<16x128xf32>
    %33 = arith.select %30, %28, %32 : vector<16x128xi1>, vector<16x128xf32>
    %c0_19 = arith.constant 0 : index
    %c0_20 = arith.constant 0 : index
    %34 = vector.load %arg8[%c0_19, %c0_20] : memref<1x16xf32, #tpu.memory_space<vmem>>, vector<1x16xf32>
    %cst_21 = arith.constant dense<0.000000e+00> : vector<1x128xf32>
    %35 = tpu.matmul %34, %33, %cst_21 {dimension_numbers = #tpu.dot_dimension_numbers<[1], [0], [0], [1], [0, 0, 1, 1], [], []>} : vector<1x16xf32>, vector<16x128xf32>, vector<1x128xf32> -> vector<1x128xf32>
    %c3 = arith.constant 3 : index
    %36 = memref.load %arg9[%c3] : memref<4xf32, #tpu.memory_space<smem>>
    %37 = vector.broadcast %36 : f32 to vector<1x128xf32>
    %38 = arith.addf %35, %37 : vector<1x128xf32>
    %c0_22 = arith.constant 0 : index
    %c0_23 = arith.constant 0 : index
    %39 = vector.load %arg10[%c0_22, %c0_23] : memref<1x128xf32, #tpu.memory_space<vmem>>, vector<1x128xf32>
    tpu.vector_store %arg10[%c0_22, %c0_23], %38 {strides = array<i32>} : memref<1x128xf32, #tpu.memory_space<vmem>>, vector<1x128xf32>,
    return
  }
  func.func @transform_0(%arg0: i32) -> (i32, i32) {
    %c0_i32 = arith.constant 0 : i32
    %c0_i32_0 = arith.constant 0 : i32
    return %arg0, %c0_i32 : i32, i32
  }
  func.func @transform_1(%arg0: i32) -> (i32, i32) {
    %c0_i32 = arith.constant 0 : i32
    %c0_i32_0 = arith.constant 0 : i32
    %c0_i32_1 = arith.constant 0 : i32
    return %c0_i32, %c0_i32_0 : i32, i32
  }
  func.func @transform_2(%arg0: i32) -> (i32, i32) {
    %c0_i32 = arith.constant 0 : i32
    %c0_i32_0 = arith.constant 0 : i32
    %c0_i32_1 = arith.constant 0 : i32
    return %c0_i32, %c0_i32_0 : i32, i32
  }
  func.func @transform_3(%arg0: i32) -> (i32, i32) {
    %c0_i32 = arith.constant 0 : i32
    %c0_i32_0 = arith.constant 0 : i32
    %c0_i32_1 = arith.constant 0 : i32
    return %c0_i32, %c0_i32_0 : i32, i32
  }
  func.func @transform_4(%arg0: i32) -> (i32, i32) {
    %c0_i32 = arith.constant 0 : i32
    %c0_i32_0 = arith.constant 0 : i32
    %c0_i32_1 = arith.constant 0 : i32
    return %c0_i32, %c0_i32_0 : i32, i32
  }
  func.func @transform_5(%arg0: i32) -> (i32, i32) {
    %c0_i32 = arith.constant 0 : i32
    %c0_i32_0 = arith.constant 0 : i32
    %c0_i32_1 = arith.constant 0 : i32
    return %c0_i32, %c0_i32_0 : i32, i32
  }
  func.func @transform_6(%arg0: i32) -> (i32, i32) {
    %c0_i32 = arith.constant 0 : i32
    %c0_i32_0 = arith.constant 0 : i32
    %c0_i32_1 = arith.constant 0 : i32
    return %c0_i32, %c0_i32_0 : i32, i32
  }
  func.func @transform_7(%arg0: i32) -> (i32, i32) {
    %c0_i32 = arith.constant 0 : i32
    %c0_i32_0 = arith.constant 0 : i32
    %c0_i32_1 = arith.constant 0 : i32
    return %c0_i32, %c0_i32_0 : i32, i32
  }
  func.func @transform_8(%arg0: i32) -> i32 {
    %c0_i32 = arith.constant 0 : i32
    %c0_i32_0 = arith.constant 0 : i32
    return %c0_i32 : i32
  }
  func.func @transform_9(%arg0: i32) -> (i32, i32) {
    %c0_i32 = arith.constant 0 : i32
    %c0_i32_0 = arith.constant 0 : i32
    return %c0_i32, %arg0 : i32, i32
  }
}

</mosaic_0001>

<llo_original>
// kernel: diabetes_network_forward.1
$region0: #{diabetes_network_forward.1}
  #allocation0 [shape = 'u32[]', space=smem, size = 0x4, offset = 0x4, fixed_abs, tag = 'smem constant byte address 0x4 - core index']
  #allocation1 [shape = 'u32[144,128]{1,0:T(1,128)}', space=vmem, size = 0x12000, scoped, tag = 'internal scratch']
  %s0 = inlined_call_operand.vmem [shape: f32[384,21], index: 0, kind: input, shape index: {}]
  %s1 = inlined_call_operand.vmem [shape: f32[64,21], index: 1, kind: input, shape index: {}]
  %s2 = inlined_call_operand.vmem [shape: f32[64,1], index: 2, kind: input, shape index: {}]
  %s3 = inlined_call_operand.vmem [shape: f32[32,64], index: 3, kind: input, shape index: {}]
  %s4 = inlined_call_operand.vmem [shape: f32[32,1], index: 4, kind: input, shape index: {}]
  %s5 = inlined_call_operand.vmem [shape: f32[16,32], index: 5, kind: input, shape index: {}]
  %s6 = inlined_call_operand.vmem [shape: f32[16,1], index: 6, kind: input, shape index: {}]
  %s7 = inlined_call_operand.vmem [shape: f32[1,16], index: 7, kind: input, shape index: {}]
  %s8 = inlined_call_operand.vmem [shape: f32[4], index: 8, kind: input, shape index: {}]
  %s9 = inlined_call_operand.vmem [shape: f32[1,384], index: 9, kind: output, shape index: {}]
  %s10 = sld [smem:[#allocation0]]
  $region73: #{diabetes_network_forward.1} parent=0
    _
  %s12 = ssub.s32 1, %s10
  %s13 = scalar_select 0, %s12, %s10
  $region1: #{diabetes_network_forward.1} parent=0
    #allocation2 [shape = 'u8[512]{0}', space=smem, size = 0x200, scoped, tag = 'input window, operand 8, single buffered']
    #allocation3 [shape = 's32[2]{0}', space=sflag, size = 0x8, scoped, tag = 'scoped memory for diabetes_network_forward.1']
    %14 = vsyncpa [#allocation3], 0
    loop: start=0, step=1, limit=5
    $region2: #{diabetes_network_forward.1} parent=1 // loop_pre_header
      _
    $region3: #{diabetes_network_forward.1} parent=1 // loop_header
      %s16 = sphi 0, %s20
      %p17 = scmp.ge.s32.totalorder %s16, 5
      %s26 = sphi 0, %s28
      %s29 = sphi 0, %s26
      %s30 = sphi 0, %s29
      %s46 = sphi 0, %s30
      %s50 = sphi 0, %s50
      %s52 = sphi 0, %s50
      %s53 = sphi 0, %s52
      %s67 = sphi 0, %s53
      %s71 = sphi 0, %s71
      %s73 = sphi 0, %s71
      %s74 = sphi 0, %s73
      %s88 = sphi 0, %s74
      %s92 = sphi 0, %s92
      %s94 = sphi 0, %s92
      %s95 = sphi 0, %s94
      %s109 = sphi 0, %s95
      %s113 = sphi 0, %s113
      %s115 = sphi 0, %s113
      %s116 = sphi 0, %s115
      %s130 = sphi 0, %s116
      %s134 = sphi 0, %s134
      %s136 = sphi 0, %s134
      %s137 = sphi 0, %s136
      %s151 = sphi 0, %s137
      %s155 = sphi 0, %s155
      %s157 = sphi 0, %s155
      %s158 = sphi 0, %s157
      %s172 = sphi 0, %s158
      %s176 = sphi 0, %s176
      %s178 = sphi 0, %s176
      %s179 = sphi 0, %s178
      %s193 = sphi 0, %s179
      %s197 = sphi 0, %s197
      %s199 = sphi 0, %s197
      %s200 = sphi 0, %s199
      %s214 = sphi 0, %s200
      %s220 = sphi 0, %s222
      %s223 = sphi 0, %s220
      %s224 = sphi 0, %s223
      %s240 = sphi 0, %s224
    $region4: #{diabetes_network_forward.1} parent=1 // loop_header_branch
      %19 = sbr.rel (%p17) target = $region8
    $region5: #{diabetes_network_forward.1} parent=1 // loop_body
      %s21 = ssub.s32 %s16, 1
      %s22 = ssub.s32 %s16, 2
      %s23 = sadd.s32 %s16, 1
      %s24 = ssub.s32 %s16, %s23
      %p25 = scmp.eq.s32.totalorder %s24, 0
      %s27 = sadd.s32 %s26, 1
      %s28 = scalar_select %p25, %s26, %s27
      %p31 = pneg %p25
      %p32 = scmp.eq.s32.totalorder %s16, 2
      %p33 = por %p31, %p32
      %p34 = scmp.ne.s32.totalorder %s26, %s29
      %p35 = scmp.eq.s32.totalorder %s16, 0
      %p36 = por %p34, %p35
      %p37 = scmp.ne.s32.totalorder %s26, %s29
      %p38 = scmp.eq.s32.totalorder %s21, 2
      %p39 = por %p37, %p38
      %p40 = scmp.ne.s32.totalorder %s29, %s30
      %p41 = scmp.eq.s32.totalorder %s21, 0
      %p42 = por %p40, %p41
      %p43 = scmp.ne.s32.totalorder %s29, %s30
      %p44 = scmp.eq.s32.totalorder %s22, 2
      %p45 = por %p43, %p44
      %p47 = scmp.ne.s32.totalorder %s30, %s46
      %p48 = scmp.eq.s32.totalorder %s22, 0
      %p49 = por %p47, %p48
      %s51 = sadd.s32 %s50, 1
      %p54 = scmp.eq.s32.totalorder %s16, 2
      %p55 = scmp.ne.s32.totalorder %s50, %s52
      %p56 = scmp.eq.s32.totalorder %s16, 0
      %p57 = por %p55, %p56
      %p58 = scmp.ne.s32.totalorder %s50, %s52
      %p59 = scmp.eq.s32.totalorder %s21, 2
      %p60 = por %p58, %p59
      %p61 = scmp.ne.s32.totalorder %s52, %s53
      %p62 = scmp.eq.s32.totalorder %s21, 0
      %p63 = por %p61, %p62
      %p64 = scmp.ne.s32.totalorder %s52, %s53
      %p65 = scmp.eq.s32.totalorder %s22, 2
      %p66 = por %p64, %p65
      %p68 = scmp.ne.s32.totalorder %s53, %s67
      %p69 = scmp.eq.s32.totalorder %s22, 0
      %p70 = por %p68, %p69
      %s72 = sadd.s32 %s71, 1
      %p75 = scmp.eq.s32.totalorder %s16, 2
      %p76 = scmp.ne.s32.totalorder %s71, %s73
      %p77 = scmp.eq.s32.totalorder %s16, 0
      %p78 = por %p76, %p77
      %p79 = scmp.ne.s32.totalorder %s71, %s73
      %p80 = scmp.eq.s32.totalorder %s21, 2
      %p81 = por %p79, %p80
      %p82 = scmp.ne.s32.totalorder %s73, %s74
      %p83 = scmp.eq.s32.totalorder %s21, 0
      %p84 = por %p82, %p83
      %p85 = scmp.ne.s32.totalorder %s73, %s74
      %p86 = scmp.eq.s32.totalorder %s22, 2
      %p87 = por %p85, %p86
      %p89 = scmp.ne.s32.totalorder %s74, %s88
      %p90 = scmp.eq.s32.totalorder %s22, 0
      %p91 = por %p89, %p90
      %s93 = sadd.s32 %s92, 1
      %p96 = scmp.eq.s32.totalorder %s16, 2
      %p97 = scmp.ne.s32.totalorder %s92, %s94
      %p98 = scmp.eq.s32.totalorder %s16, 0
      %p99 = por %p97, %p98
      %p100 = scmp.ne.s32.totalorder %s92, %s94
      %p101 = scmp.eq.s32.totalorder %s21, 2
      %p102 = por %p100, %p101
      %p103 = scmp.ne.s32.totalorder %s94, %s95
      %p104 = scmp.eq.s32.totalorder %s21, 0
      %p105 = por %p103, %p104
      %p106 = scmp.ne.s32.totalorder %s94, %s95
      %p107 = scmp.eq.s32.totalorder %s22, 2
      %p108 = por %p106, %p107
      %p110 = scmp.ne.s32.totalorder %s95, %s109
      %p111 = scmp.eq.s32.totalorder %s22, 0
      %p112 = por %p110, %p111
      %s114 = sadd.s32 %s113, 1
      %p117 = scmp.eq.s32.totalorder %s16, 2
      %p118 = scmp.ne.s32.totalorder %s113, %s115
      %p119 = scmp.eq.s32.totalorder %s16, 0
      %p120 = por %p118, %p119
      %p121 = scmp.ne.s32.totalorder %s113, %s115
      %p122 = scmp.eq.s32.totalorder %s21, 2
      %p123 = por %p121, %p122
      %p124 = scmp.ne.s32.totalorder %s115, %s116
      %p125 = scmp.eq.s32.totalorder %s21, 0
      %p126 = por %p124, %p125
      %p127 = scmp.ne.s32.totalorder %s115, %s116
      %p128 = scmp.eq.s32.totalorder %s22, 2
      %p129 = por %p127, %p128
      %p131 = scmp.ne.s32.totalorder %s116, %s130
      %p132 = scmp.eq.s32.totalorder %s22, 0
      %p133 = por %p131, %p132
      %s135 = sadd.s32 %s134, 1
      %p138 = scmp.eq.s32.totalorder %s16, 2
      %p139 = scmp.ne.s32.totalorder %s134, %s136
      %p140 = scmp.eq.s32.totalorder %s16, 0
      %p141 = por %p139, %p140
      %p142 = scmp.ne.s32.totalorder %s134, %s136
      %p143 = scmp.eq.s32.totalorder %s21, 2
      %p144 = por %p142, %p143
      %p145 = scmp.ne.s32.totalorder %s136, %s137
      %p146 = scmp.eq.s32.totalorder %s21, 0
      %p147 = por %p145, %p146
      %p148 = scmp.ne.s32.totalorder %s136, %s137
      %p149 = scmp.eq.s32.totalorder %s22, 2
      %p150 = por %p148, %p149
      %p152 = scmp.ne.s32.totalorder %s137, %s151
      %p153 = scmp.eq.s32.totalorder %s22, 0
      %p154 = por %p152, %p153
      %s156 = sadd.s32 %s155, 1
      %p159 = scmp.eq.s32.totalorder %s16, 2
      %p160 = scmp.ne.s32.totalorder %s155, %s157
      %p161 = scmp.eq.s32.totalorder %s16, 0
      %p162 = por %p160, %p161
      %p163 = scmp.ne.s32.totalorder %s155, %s157
      %p164 = scmp.eq.s32.totalorder %s21, 2
      %p165 = por %p163, %p164
      %p166 = scmp.ne.s32.totalorder %s157, %s158
      %p167 = scmp.eq.s32.totalorder %s21, 0
      %p168 = por %p166, %p167
      %p169 = scmp.ne.s32.totalorder %s157, %s158
      %p170 = scmp.eq.s32.totalorder %s22, 2
      %p171 = por %p169, %p170
      %p173 = scmp.ne.s32.totalorder %s158, %s172
      %p174 = scmp.eq.s32.totalorder %s22, 0
      %p175 = por %p173, %p174
      %s177 = sadd.s32 %s176, 1
      %p180 = scmp.eq.s32.totalorder %s16, 2
      %p181 = scmp.ne.s32.totalorder %s176, %s178
      %p182 = scmp.eq.s32.totalorder %s16, 0
      %p183 = por %p181, %p182
      %p184 = scmp.ne.s32.totalorder %s176, %s178
      %p185 = scmp.eq.s32.totalorder %s21, 2
      %p186 = por %p184, %p185
      %p187 = scmp.ne.s32.totalorder %s178, %s179
      %p188 = scmp.eq.s32.totalorder %s21, 0
      %p189 = por %p187, %p188
      %p190 = scmp.ne.s32.totalorder %s178, %s179
      %p191 = scmp.eq.s32.totalorder %s22, 2
      %p192 = por %p190, %p191
      %p194 = scmp.ne.s32.totalorder %s179, %s193
      %p195 = scmp.eq.s32.totalorder %s22, 0
      %p196 = por %p194, %p195
      %s198 = sadd.s32 %s197, 1
      %p201 = scmp.eq.s32.totalorder %s16, 2
      %p202 = scmp.ne.s32.totalorder %s197, %s199
      %p203 = scmp.eq.s32.totalorder %s16, 0
      %p204 = por %p202, %p203
      %p205 = scmp.ne.s32.totalorder %s197, %s199
      %p206 = scmp.eq.s32.totalorder %s21, 2
      %p207 = por %p205, %p206
      %p208 = scmp.ne.s32.totalorder %s199, %s200
      %p209 = scmp.eq.s32.totalorder %s21, 0
      %p210 = por %p208, %p209
      %p211 = scmp.ne.s32.totalorder %s199, %s200
      %p212 = scmp.eq.s32.totalorder %s22, 2
      %p213 = por %p211, %p212
      %p215 = scmp.ne.s32.totalorder %s200, %s214
      %p216 = scmp.eq.s32.totalorder %s22, 0
      %p217 = por %p215, %p216
      %s218 = ssub.s32 %s16, %s23
      %p219 = scmp.eq.s32.totalorder %s218, 0
      %s221 = sadd.s32 %s220, 1
      %s222 = scalar_select %p219, %s220, %s221
      %p225 = pneg %p219
      %p226 = scmp.eq.s32.totalorder %s16, 2
      %p227 = por %p225, %p226
      %p228 = scmp.ne.s32.totalorder %s220, %s223
      %p229 = scmp.eq.s32.totalorder %s16, 0
      %p230 = por %p228, %p229
      %p231 = scmp.ne.s32.totalorder %s220, %s223
      %p232 = scmp.eq.s32.totalorder %s21, 2
      %p233 = por %p231, %p232
      %p234 = scmp.ne.s32.totalorder %s223, %s224
      %p235 = scmp.eq.s32.totalorder %s21, 0
      %p236 = por %p234, %p235
      %p237 = scmp.ne.s32.totalorder %s223, %s224
      %p238 = scmp.eq.s32.totalorder %s22, 2
      %p239 = por %p237, %p238
      %p241 = scmp.ne.s32.totalorder %s224, %s240
      %p242 = scmp.eq.s32.totalorder %s22, 0
      %p243 = por %p241, %p242
      %p244 = scmp.le.s32.totalorder 1, %s16
      %p245 = scmp.lt.s32.totalorder %s16, 4
      %p246 = pnand %p244, %p245
      %p247 = pneg %p246
      // Predicated region
      $region9: #{diabetes_network_forward.1} parent=5 // pred_check
        _
      $region10: #{diabetes_network_forward.1} parent=5 // pred_check_branch
        %249 = sbr.rel (%p246) target = $region12
      $region11: #{diabetes_network_forward.1} parent=5 // pred_region
        %s250 = ssub.s32 %s16, 1
        // Predicated region
        $region13: #{diabetes_network_forward.1} parent=11 // pred_check
          %p251 = pneg %p63
        $region14: #{diabetes_network_forward.1} parent=11 // pred_check_branch
          %253 = sbr.rel (%p251) target = $region16
        $region15: #{diabetes_network_forward.1} parent=11 // pred_region
          _
        $region16: #{diabetes_network_forward.1} parent=11 // pred_fallthru
          _
        // Predicated region
        $region17: #{diabetes_network_forward.1} parent=11 // pred_check
          %p254 = pneg %p84
        $region18: #{diabetes_network_forward.1} parent=11 // pred_check_branch
          %256 = sbr.rel (%p254) target = $region20
        $region19: #{diabetes_network_forward.1} parent=11 // pred_region
          _
        $region20: #{diabetes_network_forward.1} parent=11 // pred_fallthru
          _
        // Predicated region
        $region21: #{diabetes_network_forward.1} parent=11 // pred_check
          %p257 = pneg %p105
        $region22: #{diabetes_network_forward.1} parent=11 // pred_check_branch
          %259 = sbr.rel (%p257) target = $region24
        $region23: #{diabetes_network_forward.1} parent=11 // pred_region
          _
        $region24: #{diabetes_network_forward.1} parent=11 // pred_fallthru
          _
        // Predicated region
        $region25: #{diabetes_network_forward.1} parent=11 // pred_check
          %p260 = pneg %p126
        $region26: #{diabetes_network_forward.1} parent=11 // pred_check_branch
          %262 = sbr.rel (%p260) target = $region28
        $region27: #{diabetes_network_forward.1} parent=11 // pred_region
          _
        $region28: #{diabetes_network_forward.1} parent=11 // pred_fallthru
          _
        // Predicated region
        $region29: #{diabetes_network_forward.1} parent=11 // pred_check
          %p263 = pneg %p147
        $region30: #{diabetes_network_forward.1} parent=11 // pred_check_branch
          %265 = sbr.rel (%p263) target = $region32
        $region31: #{diabetes_network_forward.1} parent=11 // pred_region
          _
        $region32: #{diabetes_network_forward.1} parent=11 // pred_fallthru
          _
        // Predicated region
        $region33: #{diabetes_network_forward.1} parent=11 // pred_check
          %p266 = pneg %p168
        $region34: #{diabetes_network_forward.1} parent=11 // pred_check_branch
          %268 = sbr.rel (%p266) target = $region36
        $region35: #{diabetes_network_forward.1} parent=11 // pred_region
          _
        $region36: #{diabetes_network_forward.1} parent=11 // pred_fallthru
          _
        // Predicated region
        $region37: #{diabetes_network_forward.1} parent=11 // pred_check
          %p269 = pneg %p189
        $region38: #{diabetes_network_forward.1} parent=11 // pred_check_branch
          %271 = sbr.rel (%p269) target = $region40
        $region39: #{diabetes_network_forward.1} parent=11 // pred_region
          _
        $region40: #{diabetes_network_forward.1} parent=11 // pred_fallthru
          _
        // Predicated region
        $region41: #{diabetes_network_forward.1} parent=11 // pred_check
          %p272 = pneg %p210
        $region42: #{diabetes_network_forward.1} parent=11 // pred_check_branch
          %274 = sbr.rel (%p272) target = $region44
        $region43: #{diabetes_network_forward.1} parent=11 // pred_region
          %s276 = ssub.s32 16, 16
          %277 = vsyncadd [#allocation3], %s276
          %s279 = sshll.u32 %s8, 4
          %s280 = int_to_ptr.vmem [resolvable:$true] %s279
          %282 = dma.vmem_to_smem %s280, 16, [#allocation2], [#allocation3]
        $region44: #{diabetes_network_forward.1} parent=11 // pred_fallthru
          _
      $region12: #{diabetes_network_forward.1} parent=5 // pred_fallthru
        _
      %p283 = scmp.lt.s32.totalorder %s16, 3
      // Predicated region
      $region45: #{diabetes_network_forward.1} parent=5 // pred_check
        %p284 = pneg %p283
      $region46: #{diabetes_network_forward.1} parent=5 // pred_check_branch
        %286 = sbr.rel (%p284) target = $region48
      $region47: #{diabetes_network_forward.1} parent=5 // pred_region
        // Predicated region
        $region49: #{diabetes_network_forward.1} parent=47 // pred_check
          %p287 = pneg %p36
        $region50: #{diabetes_network_forward.1} parent=47 // pred_check_branch
          %289 = sbr.rel (%p287) target = $region52
        $region51: #{diabetes_network_forward.1} parent=47 // pred_region
          %s290 = smul.u32 16, %s16
          %p291 = scmp.lt.s32.totalorder %s290, 47
          %s292 = scalar_select %p291, %s290, 47
          %s293 = smul.addr %s292, 8
          %s294 = scalar_lea.vmem %s0, %s293
          %s295 = smul.u32 16, %s16
        $region52: #{diabetes_network_forward.1} parent=47 // pred_fallthru
          _
      $region48: #{diabetes_network_forward.1} parent=5 // pred_fallthru
        _
      %p296 = scmp.le.s32.totalorder 1, %s16
      %p297 = scmp.lt.s32.totalorder %s16, 4
      %p298 = pnand %p296, %p297
      %p299 = pneg %p298
      // Predicated region
      $region53: #{diabetes_network_forward.1} parent=5 // pred_check
        _
      $region54: #{diabetes_network_forward.1} parent=5 // pred_check_branch
        %301 = sbr.rel (%p298) target = $region56
      $region55: #{diabetes_network_forward.1} parent=5 // pred_region
        %s302 = ssub.s32 %s16, 1
        // Predicated region
        $region57: #{diabetes_network_forward.1} parent=55 // pred_check
          %p303 = pneg %p210
        $region58: #{diabetes_network_forward.1} parent=55 // pred_check_branch
          %305 = sbr.rel (%p303) target = $region60
        $region59: #{diabetes_network_forward.1} parent=55 // pred_region
          %306 = dma.done [#allocation3], 16
        $region60: #{diabetes_network_forward.1} parent=55 // pred_fallthru
          _
        %307 = sfence
        %s308 = smul.u32 16, %s21
        %p309 = scmp.lt.s32.totalorder %s308, 47
        %s310 = scalar_select %p309, %s308, 47
        %s311 = smul.addr %s310, 8
        %s312 = scalar_lea.vmem %s0, %s311
        %p313 = pneg %p42
        %p314 = pneg %p39
        %p315 = pneg %p63
        %p316 = pneg %p60
        %p317 = pneg %p84
        %p318 = pneg %p81
        %p319 = pneg %p105
        %p320 = pneg %p102
        %p321 = pneg %p126
        %p322 = pneg %p123
        %p323 = pneg %p147
        %p324 = pneg %p144
        %p325 = pneg %p168
        %p326 = pneg %p165
        %p327 = pneg %p189
        %p328 = pneg %p186
        %p329 = pneg %p210
        %p330 = pneg %p207
        %p331 = pneg %p236
        %p332 = pneg %p233
        %p333 = scmp.lt.s32.totalorder %s21, 2
        %s334 = scalar_select %p333, %s21, 2
        %s335 = scalar_lea.vmem %s9, %s334
        %s336 = smul.u32 16, %s21
        %p337 = scmp.lt.s32.totalorder %s336, 47
        %s338 = scalar_select %p337, %s336, 47
        %s339 = smul.addr %s338, 8
        %s340 = scalar_lea.vmem %s0, %s339
        %s341 = smul.u32 16, %s21
        %p342 = scmp.lt.s32.totalorder %s21, 2
        %s343 = scalar_select %p342, %s21, 2
        %s344 = scalar_lea.vmem %s9, %s343
        %v345 = vld [vmem:[%s340] sm:$0xff]
        %v346 = vld [vmem:[%s340 + $0x8] sm:$0xff]
        %v347 = vld [vmem:[%s340 + $0x10] sm:$0xff]
        %v348 = vld [vmem:[%s340 + $0x18] sm:$0xff]
        %v349 = vld [vmem:[%s340 + $0x20] sm:$0xff]
        %v350 = vld [vmem:[%s340 + $0x28] sm:$0xff]
        %v351 = vld [vmem:[%s340 + $0x30] sm:$0xff]
        %v352 = vld [vmem:[%s340 + $0x38] sm:$0xff]
        %v353 = vld [vmem:[%s340 + $0x40] sm:$0xff]
        %v354 = vld [vmem:[%s340 + $0x48] sm:$0xff]
        %v355 = vld [vmem:[%s340 + $0x50] sm:$0xff]
        %v356 = vld [vmem:[%s340 + $0x58] sm:$0xff]
        %v357 = vld [vmem:[%s340 + $0x60] sm:$0xff]
        %v358 = vld [vmem:[%s340 + $0x68] sm:$0xff]
        %v359 = vld [vmem:[%s340 + $0x70] sm:$0xff]
        %v360 = vld [vmem:[%s340 + $0x78] sm:$0xff]
        %v361 = vld [vmem:[%s1] sm:$0xff]
        %v362 = vld [vmem:[%s1 + $0x8] sm:$0xff]
        %v363 = vld [vmem:[%s1 + $0x10] sm:$0xff]
        %v364 = vld [vmem:[%s1 + $0x18] sm:$0xff]
        %v365 = vld [vmem:[%s1 + $0x20] sm:$0xff]
        %v366 = vld [vmem:[%s1 + $0x28] sm:$0xff]
        %v367 = vld [vmem:[%s1 + $0x30] sm:$0xff]
        %v368 = vld [vmem:[%s1 + $0x38] sm:$0xff]
        %v369 = vld [vmem:[%s2] sm:$0xff]
        %v370 = vld [vmem:[%s2 + $0x8] sm:$0xff]
        %v371 = vld [vmem:[%s2 + $0x10] sm:$0xff]
        %v372 = vld [vmem:[%s2 + $0x18] sm:$0xff]
        %v373 = vld [vmem:[%s2 + $0x20] sm:$0xff]
        %v374 = vld [vmem:[%s2 + $0x28] sm:$0xff]
        %v375 = vld [vmem:[%s2 + $0x30] sm:$0xff]
        %v376 = vld [vmem:[%s2 + $0x38] sm:$0xff]
        %378 = vset.pattern.permute.xlu0 0
        %379 = vperm.xlu0 %378, %v369
        %v380 = vpop.permute.xlu0 %379
        %383 = vset.pattern.permute.xlu0 0
        %384 = vperm.xlu0 %383, %v370
        %v385 = vpop.permute.xlu0 %384
        %388 = vset.pattern.permute.xlu0 0
        %389 = vperm.xlu0 %388, %v371
        %v390 = vpop.permute.xlu0 %389
        %393 = vset.pattern.permute.xlu0 0
        %394 = vperm.xlu0 %393, %v372
        %v395 = vpop.permute.xlu0 %394
        %398 = vset.pattern.permute.xlu0 0
        %399 = vperm.xlu0 %398, %v373
        %v400 = vpop.permute.xlu0 %399
        %403 = vset.pattern.permute.xlu0 0
        %404 = vperm.xlu0 %403, %v374
        %v405 = vpop.permute.xlu0 %404
        %408 = vset.pattern.permute.xlu0 0
        %409 = vperm.xlu0 %408, %v375
        %v410 = vpop.permute.xlu0 %409
        %413 = vset.pattern.permute.xlu0 0
        %414 = vperm.xlu0 %413, %v376
        %v415 = vpop.permute.xlu0 %414
        %vm417 = vcmask 171008
        %v419 = vsel %vm417, %v361, 0
        %v422 = vsel %vm417, %v362, 0
        %v425 = vsel %vm417, %v363, 0
        %v428 = vsel %vm417, %v364, 0
        %v431 = vsel %vm417, %v365, 0
        %v434 = vsel %vm417, %v366, 0
        %v437 = vsel %vm417, %v367, 0
        %v440 = vsel %vm417, %v368, 0
        %v443 = vsel %vm417, %v345, 0
        %v446 = vsel %vm417, %v346, 0
        %v449 = vsel %vm417, %v347, 0
        %v452 = vsel %vm417, %v348, 0
        %v455 = vsel %vm417, %v349, 0
        %v458 = vsel %vm417, %v350, 0
        %v461 = vsel %vm417, %v351, 0
        %v464 = vsel %vm417, %v352, 0
        %v467 = vsel %vm417, %v353, 0
        %v470 = vsel %vm417, %v354, 0
        %v473 = vsel %vm417, %v355, 0
        %v476 = vsel %vm417, %v356, 0
        %v479 = vsel %vm417, %v357, 0
        %v482 = vsel %vm417, %v358, 0
        %v485 = vsel %vm417, %v359, 0
        %v488 = vsel %vm417, %v360, 0
        %490 = vmatprep.subr.mxu0 0.0
        %491 = vmatpush1.xpose.msra.mxu0 %v443
        %492 = vmatprep.subr.mxu0 0.0
        %493 = vmatpush1.xpose.msra.mxu0 %v446
        %494 = vmatprep.subr.mxu0 0.0
        %495 = vmatpush1.xpose.msra.mxu0 %v449
        %496 = vmatprep.subr.mxu0 0.0
        %497 = vmatpush1.xpose.msra.mxu0 %v452
        %498 = vmatprep.subr.mxu0 0.0
        %499 = vmatpush1.xpose.msra.mxu0 %v455
        %500 = vmatprep.subr.mxu0 0.0
        %501 = vmatpush1.xpose.msra.mxu0 %v458
        %502 = vmatprep.subr.mxu0 0.0
        %503 = vmatpush1.xpose.msra.mxu0 %v461
        %504 = vmatprep.subr.mxu0 0.0
        %505 = vmatpush1.xpose.msra.mxu0 %v464
        %506 = vmatprep.subr.mxu0 0.0
        %507 = vmatpush1.xpose.msra.mxu0 %v467
        %508 = vmatprep.subr.mxu0 0.0
        %509 = vmatpush1.xpose.msra.mxu0 %v470
        %510 = vmatprep.subr.mxu0 0.0
        %511 = vmatpush1.xpose.msra.mxu0 %v473
        %512 = vmatprep.subr.mxu0 0.0
        %513 = vmatpush1.xpose.msra.mxu0 %v476
        %514 = vmatprep.subr.mxu0 0.0
        %515 = vmatpush1.xpose.msra.mxu0 %v479
        %516 = vmatprep.subr.mxu0 0.0
        %517 = vmatpush1.xpose.msra.mxu0 %v482
        %518 = vmatprep.subr.mxu0 0.0
        %519 = vmatpush1.xpose.msra.mxu0 %v485
        %520 = vmatprep.subr.mxu0 0.0
        %521 = vmatpush1.xpose.msra.mxu0 %v488
        %522 = vmatprep.subr.mxu0 0.0
        %523 = vmatpush1.xpose.msra.mxu0 0.0
        %524 = vmatprep.subr.mxu0 0.0
        %525 = vmatpush1.xpose.msra.mxu0 0.0
        %526 = vmatprep.subr.mxu0 0.0
        %527 = vmatpush1.xpose.msra.mxu0 0.0
        %528 = vmatprep.subr.mxu0 0.0
        %529 = vmatpush1.xpose.msra.mxu0 0.0
        %530 = vmatprep.subr.mxu0 0.0
        %531 = vmatpush1.xpose.msra.mxu0 0.0
        %532 = vmatprep.subr.mxu0 0.0
        %533 = vmatpush1.xpose.msra.mxu0 0.0
        %534 = vmatprep.subr.mxu0 0.0
        %535 = vmatpush1.xpose.msra.mxu0 0.0
        %536 = vmatprep.subr.mxu0 0.0
        %537 = vmatpush1.xpose.msra.mxu0 0.0
        %538 = vmatprep.subr.mxu0 0.0
        %539 = vmatpush1.xpose.msra.mxu0 0.0
        %540 = vmatprep.subr.mxu0 0.0
        %541 = vmatpush1.xpose.msra.mxu0 0.0
        %542 = vmatprep.subr.mxu0 0.0
        %543 = vmatpush1.xpose.msra.mxu0 0.0
        %544 = vmatprep.subr.mxu0 0.0
        %545 = vmatpush1.xpose.msra.mxu0 0.0
        %546 = vmatprep.subr.mxu0 0.0
        %547 = vmatpush1.xpose.msra.mxu0 0.0
        %548 = vmatprep.subr.mxu0 0.0
        %549 = vmatpush1.xpose.msra.mxu0 0.0
        %550 = vmatprep.subr.mxu0 0.0
        %551 = vmatpush1.xpose.msra.mxu0 0.0
        %552 = vmatprep.subr.mxu0 0.0
        %553 = vmatpush1.xpose.msra.mxu0 0.0
        %554 = vmatprep.mubr.f32.mxu0 0.0
        %555 = vmatmul.mubr.f32.gmra.mrb[0].mxu0 %v419
        %v556 = vpop.f32.mrb[0].mxu0
        %v557 = vadd.f32 %v380, %v556
        %v558 = vpop.f32.mrb[0].mxu0
        %559 = vmatprep.mubr.f32.mxu0 0.0
        %560 = vmatmul.mubr.f32.gmra.mrb[0].mxu0 %v422
        %v561 = vpop.f32.mrb[0].mxu0
        %v562 = vadd.f32 %v385, %v561
        %v563 = vpop.f32.mrb[0].mxu0
        %564 = vmatprep.mubr.f32.mxu0 0.0
        %565 = vmatmul.mubr.f32.gmra.mrb[0].mxu0 %v425
        %v566 = vpop.f32.mrb[0].mxu0
        %v567 = vadd.f32 %v390, %v566
        %v568 = vpop.f32.mrb[0].mxu0
        %569 = vmatprep.mubr.f32.mxu0 0.0
        %570 = vmatmul.mubr.f32.gmra.mrb[0].mxu0 %v428
        %v571 = vpop.f32.mrb[0].mxu0
        %v572 = vadd.f32 %v395, %v571
        %v573 = vpop.f32.mrb[0].mxu0
        %574 = vmatprep.mubr.f32.mxu0 0.0
        %575 = vmatmul.mubr.f32.gmra.mrb[0].mxu0 %v431
        %v576 = vpop.f32.mrb[0].mxu0
        %v577 = vadd.f32 %v400, %v576
        %v578 = vpop.f32.mrb[0].mxu0
        %579 = vmatprep.mubr.f32.mxu0 0.0
        %580 = vmatmul.mubr.f32.gmra.mrb[0].mxu0 %v434
        %v581 = vpop.f32.mrb[0].mxu0
        %v582 = vadd.f32 %v405, %v581
        %v583 = vpop.f32.mrb[0].mxu0
        %584 = vmatprep.mubr.f32.mxu0 0.0
        %585 = vmatmul.mubr.f32.gmra.mrb[0].mxu0 %v437
        %v586 = vpop.f32.mrb[0].mxu0
        %v587 = vadd.f32 %v410, %v586
        %v588 = vpop.f32.mrb[0].mxu0
        %589 = vmatprep.mubr.f32.mxu0 0.0
        %590 = vmatmul.mubr.f32.gmra.mrb[0].mxu0 %v440
        %v591 = vpop.f32.mrb[0].mxu0
        %v592 = vadd.f32 %v415, %v591
        %v593 = vpop.f32.mrb[0].mxu0
        %594 = vdwg.mxu0
        %vm595 = vcmp.gt.f32.partialorder %v557, 0.0
        %vm596 = vcmp.gt.f32.partialorder %v562, 0.0
        %vm597 = vcmp.gt.f32.partialorder %v567, 0.0
        %vm598 = vcmp.gt.f32.partialorder %v572, 0.0
        %vm599 = vcmp.gt.f32.partialorder %v577, 0.0
        %vm600 = vcmp.gt.f32.partialorder %v582, 0.0
        %vm601 = vcmp.gt.f32.partialorder %v587, 0.0
        %vm602 = vcmp.gt.f32.partialorder %v592, 0.0
        %s603 = sld [smem:[#allocation2]]
        %v604 = vstv %s603
        %v605 = vmul.f32 %v604, %v557
        %v606 = vmul.f32 %v604, %v562
        %v607 = vmul.f32 %v604, %v567
        %v608 = vmul.f32 %v604, %v572
        %v609 = vmul.f32 %v604, %v577
        %v610 = vmul.f32 %v604, %v582
        %v611 = vmul.f32 %v604, %v587
        %v612 = vmul.f32 %v604, %v592
        %v613 = vsel %vm595, %v557, %v605
        %v614 = vsel %vm596, %v562, %v606
        %v615 = vsel %vm597, %v567, %v607
        %v616 = vsel %vm598, %v572, %v608
        %v617 = vsel %vm599, %v577, %v609
        %v618 = vsel %vm600, %v582, %v610
        %v619 = vsel %vm601, %v587, %v611
        %v620 = vsel %vm602, %v592, %v612
        %s621 = sld [smem:[#allocation2 + $0x1]]
        %v622 = vld [vmem:[%s3] sm:$0xff]
        %v623 = vld [vmem:[%s3 + $0x8] sm:$0xff]
        %v624 = vld [vmem:[%s3 + $0x10] sm:$0xff]
        %v625 = vld [vmem:[%s3 + $0x18] sm:$0xff]
        %v626 = vld [vmem:[%s4] sm:$0xff]
        %v627 = vld [vmem:[%s4 + $0x8] sm:$0xff]
        %v628 = vld [vmem:[%s4 + $0x10] sm:$0xff]
        %v629 = vld [vmem:[%s4 + $0x18] sm:$0xff]
        %631 = vset.pattern.permute.xlu0 0
        %632 = vperm.xlu0 %631, %v626
        %v633 = vpop.permute.xlu0 %632
        %636 = vset.pattern.permute.xlu0 0
        %637 = vperm.xlu0 %636, %v627
        %v638 = vpop.permute.xlu0 %637
        %641 = vset.pattern.permute.xlu0 0
        %642 = vperm.xlu0 %641, %v628
        %v643 = vpop.permute.xlu0 %642
        %646 = vset.pattern.permute.xlu0 0
        %647 = vperm.xlu0 %646, %v629
        %v648 = vpop.permute.xlu0 %647
        %vm650 = vcmask 523264
        %v652 = vsel %vm650, %v622, 0
        %v655 = vsel %vm650, %v623, 0
        %v658 = vsel %vm650, %v624, 0
        %v661 = vsel %vm650, %v625, 0
        %663 = vmatprep.subr.mxu0 0.0
        %664 = vmatpush1.msra.mxu0 %v613
        %665 = vmatprep.subr.mxu0 0.0
        %666 = vmatpush1.msra.mxu0 %v614
        %667 = vmatprep.subr.mxu0 0.0
        %668 = vmatpush1.msra.mxu0 %v615
        %669 = vmatprep.subr.mxu0 0.0
        %670 = vmatpush1.msra.mxu0 %v616
        %671 = vmatprep.subr.mxu0 0.0
        %672 = vmatpush1.msra.mxu0 %v617
        %673 = vmatprep.subr.mxu0 0.0
        %674 = vmatpush1.msra.mxu0 %v618
        %675 = vmatprep.subr.mxu0 0.0
        %676 = vmatpush1.msra.mxu0 %v619
        %677 = vmatprep.subr.mxu0 0.0
        %678 = vmatpush1.msra.mxu0 %v620
        %679 = vmatprep.subr.mxu0 0.0
        %680 = vmatpush1.msra.mxu0 0.0
        %681 = vmatprep.subr.mxu0 0.0
        %682 = vmatpush1.msra.mxu0 0.0
        %683 = vmatprep.subr.mxu0 0.0
        %684 = vmatpush1.msra.mxu0 0.0
        %685 = vmatprep.subr.mxu0 0.0
        %686 = vmatpush1.msra.mxu0 0.0
        %687 = vmatprep.subr.mxu0 0.0
        %688 = vmatpush1.msra.mxu0 0.0
        %689 = vmatprep.subr.mxu0 0.0
        %690 = vmatpush1.msra.mxu0 0.0
        %691 = vmatprep.subr.mxu0 0.0
        %692 = vmatpush1.msra.mxu0 0.0
        %693 = vmatprep.subr.mxu0 0.0
        %694 = vmatpush1.msra.mxu0 0.0
        %695 = vmatprep.subr.mxu0 0.0
        %696 = vmatpush1.msra.mxu0 0.0
        %697 = vmatprep.subr.mxu0 0.0
        %698 = vmatpush1.msra.mxu0 0.0
        %699 = vmatprep.subr.mxu0 0.0
        %700 = vmatpush1.msra.mxu0 0.0
        %701 = vmatprep.subr.mxu0 0.0
        %702 = vmatpush1.msra.mxu0 0.0
        %703 = vmatprep.subr.mxu0 0.0
        %704 = vmatpush1.msra.mxu0 0.0
        %705 = vmatprep.subr.mxu0 0.0
        %706 = vmatpush1.msra.mxu0 0.0
        %707 = vmatprep.subr.mxu0 0.0
        %708 = vmatpush1.msra.mxu0 0.0
        %709 = vmatprep.subr.mxu0 0.0
        %710 = vmatpush1.msra.mxu0 0.0
        %711 = vmatprep.subr.mxu0 0.0
        %712 = vmatpush1.msra.mxu0 0.0
        %713 = vmatprep.subr.mxu0 0.0
        %714 = vmatpush1.msra.mxu0 0.0
        %715 = vmatprep.subr.mxu0 0.0
        %716 = vmatpush1.msra.mxu0 0.0
        %717 = vmatprep.subr.mxu0 0.0
        %718 = vmatpush1.msra.mxu0 0.0
        %719 = vmatprep.subr.mxu0 0.0
        %720 = vmatpush1.msra.mxu0 0.0
        %721 = vmatprep.subr.mxu0 0.0
        %722 = vmatpush1.msra.mxu0 0.0
        %723 = vmatprep.subr.mxu0 0.0
        %724 = vmatpush1.msra.mxu0 0.0
        %725 = vmatprep.subr.mxu0 0.0
        %726 = vmatpush1.msra.mxu0 0.0
        %727 = vmatprep.mubr.f32.mxu0 0.0
        %728 = vmatmul.mubr.f32.gmra.mrb[0].mxu0 %v652
        %v729 = vpop.f32.mrb[0].mxu0
        %v730 = vadd.f32 %v633, %v729
        %v731 = vpop.f32.mrb[0].mxu0
        %732 = vmatprep.mubr.f32.mxu0 0.0
        %733 = vmatmul.mubr.f32.gmra.mrb[0].mxu0 %v655
        %v734 = vpop.f32.mrb[0].mxu0
        %v735 = vadd.f32 %v638, %v734
        %v736 = vpop.f32.mrb[0].mxu0
        %737 = vmatprep.mubr.f32.mxu0 0.0
        %738 = vmatmul.mubr.f32.gmra.mrb[0].mxu0 %v658
        %v739 = vpop.f32.mrb[0].mxu0
        %v740 = vadd.f32 %v643, %v739
        %v741 = vpop.f32.mrb[0].mxu0
        %742 = vmatprep.mubr.f32.mxu0 0.0
        %743 = vmatmul.mubr.f32.gmra.mrb[0].mxu0 %v661
        %v744 = vpop.f32.mrb[0].mxu0
        %v745 = vadd.f32 %v648, %v744
        %v746 = vpop.f32.mrb[0].mxu0
        %747 = vdwg.mxu0
        %vm748 = vcmp.gt.f32.partialorder %v730, 0.0
        %vm749 = vcmp.gt.f32.partialorder %v735, 0.0
        %vm750 = vcmp.gt.f32.partialorder %v740, 0.0
        %vm751 = vcmp.gt.f32.partialorder %v745, 0.0
        %v752 = vstv %s621
        %v753 = vmul.f32 %v752, %v730
        %v754 = vmul.f32 %v752, %v735
        %v755 = vmul.f32 %v752, %v740
        %v756 = vmul.f32 %v752, %v745
        %v757 = vsel %vm748, %v730, %v753
        %v758 = vsel %vm749, %v735, %v754
        %v759 = vsel %vm750, %v740, %v755
        %v760 = vsel %vm751, %v745, %v756
        %s761 = sld [smem:[#allocation2 + $0x2]]
        %v762 = vld [vmem:[%s5] sm:$0xff]
        %v763 = vld [vmem:[%s5 + $0x8] sm:$0xff]
        %v764 = vld [vmem:[%s6] sm:$0xff]
        %v765 = vld [vmem:[%s6 + $0x8] sm:$0xff]
        %767 = vset.pattern.permute.xlu0 0
        %768 = vperm.xlu0 %767, %v764
        %v769 = vpop.permute.xlu0 %768
        %772 = vset.pattern.permute.xlu0 0
        %773 = vperm.xlu0 %772, %v765
        %v774 = vpop.permute.xlu0 %773
        %vm776 = vcmask 261120
        %v778 = vsel %vm776, %v762, 0
        %v781 = vsel %vm776, %v763, 0
        %783 = vmatprep.subr.mxu0 0.0
        %784 = vmatpush1.msra.mxu0 %v757
        %785 = vmatprep.subr.mxu0 0.0
        %786 = vmatpush1.msra.mxu0 %v758
        %787 = vmatprep.subr.mxu0 0.0
        %788 = vmatpush1.msra.mxu0 %v759
        %789 = vmatprep.subr.mxu0 0.0
        %790 = vmatpush1.msra.mxu0 %v760
        %791 = vmatprep.subr.mxu0 0.0
        %792 = vmatpush1.msra.mxu0 0.0
        %793 = vmatprep.subr.mxu0 0.0
        %794 = vmatpush1.msra.mxu0 0.0
        %795 = vmatprep.subr.mxu0 0.0
        %796 = vmatpush1.msra.mxu0 0.0
        %797 = vmatprep.subr.mxu0 0.0
        %798 = vmatpush1.msra.mxu0 0.0
        %799 = vmatprep.subr.mxu0 0.0
        %800 = vmatpush1.msra.mxu0 0.0
        %801 = vmatprep.subr.mxu0 0.0
        %802 = vmatpush1.msra.mxu0 0.0
        %803 = vmatprep.subr.mxu0 0.0
        %804 = vmatpush1.msra.mxu0 0.0
        %805 = vmatprep.subr.mxu0 0.0
        %806 = vmatpush1.msra.mxu0 0.0
        %807 = vmatprep.subr.mxu0 0.0
        %808 = vmatpush1.msra.mxu0 0.0
        %809 = vmatprep.subr.mxu0 0.0
        %810 = vmatpush1.msra.mxu0 0.0
        %811 = vmatprep.subr.mxu0 0.0
        %812 = vmatpush1.msra.mxu0 0.0
        %813 = vmatprep.subr.mxu0 0.0
        %814 = vmatpush1.msra.mxu0 0.0
        %815 = vmatprep.subr.mxu0 0.0
        %816 = vmatpush1.msra.mxu0 0.0
        %817 = vmatprep.subr.mxu0 0.0
        %818 = vmatpush1.msra.mxu0 0.0
        %819 = vmatprep.subr.mxu0 0.0
        %820 = vmatpush1.msra.mxu0 0.0
        %821 = vmatprep.subr.mxu0 0.0
        %822 = vmatpush1.msra.mxu0 0.0
        %823 = vmatprep.subr.mxu0 0.0
        %824 = vmatpush1.msra.mxu0 0.0
        %825 = vmatprep.subr.mxu0 0.0
        %826 = vmatpush1.msra.mxu0 0.0
        %827 = vmatprep.subr.mxu0 0.0
        %828 = vmatpush1.msra.mxu0 0.0
        %829 = vmatprep.subr.mxu0 0.0
        %830 = vmatpush1.msra.mxu0 0.0
        %831 = vmatprep.subr.mxu0 0.0
        %832 = vmatpush1.msra.mxu0 0.0
        %833 = vmatprep.subr.mxu0 0.0
        %834 = vmatpush1.msra.mxu0 0.0
        %835 = vmatprep.subr.mxu0 0.0
        %836 = vmatpush1.msra.mxu0 0.0
        %837 = vmatprep.subr.mxu0 0.0
        %838 = vmatpush1.msra.mxu0 0.0
        %839 = vmatprep.subr.mxu0 0.0
        %840 = vmatpush1.msra.mxu0 0.0
        %841 = vmatprep.subr.mxu0 0.0
        %842 = vmatpush1.msra.mxu0 0.0
        %843 = vmatprep.subr.mxu0 0.0
        %844 = vmatpush1.msra.mxu0 0.0
        %845 = vmatprep.subr.mxu0 0.0
        %846 = vmatpush1.msra.mxu0 0.0
        %847 = vmatprep.mubr.f32.mxu0 0.0
        %848 = vmatmul.mubr.f32.gmra.mrb[0].mxu0 %v778
        %v849 = vpop.f32.mrb[0].mxu0
        %v850 = vadd.f32 %v769, %v849
        %v851 = vpop.f32.mrb[0].mxu0
        %852 = vmatprep.mubr.f32.mxu0 0.0
        %853 = vmatmul.mubr.f32.gmra.mrb[0].mxu0 %v781
        %v854 = vpop.f32.mrb[0].mxu0
        %v855 = vadd.f32 %v774, %v854
        %v856 = vpop.f32.mrb[0].mxu0
        %857 = vdwg.mxu0
        %vm858 = vcmp.gt.f32.partialorder %v850, 0.0
        %vm859 = vcmp.gt.f32.partialorder %v855, 0.0
        %v860 = vstv %s761
        %v861 = vmul.f32 %v860, %v850
        %v862 = vmul.f32 %v860, %v855
        %v863 = vsel %vm858, %v850, %v861
        %v864 = vsel %vm859, %v855, %v862
        %v865 = vld [vmem:[%s7] sm:$0x1]
        %s866 = sld [smem:[#allocation2 + $0x3]]
        %v867 = vstv %s866
        %vm868 = vcmask 130048
        %v870 = vsel %vm868, %v865, 0
        %872 = vmatprep.subr.mxu0 0.0
        %873 = vmatpush1.msra.mxu0 %v863
        %874 = vmatprep.subr.mxu0 0.0
        %875 = vmatpush1.msra.mxu0 %v864
        %876 = vmatprep.subr.mxu0 0.0
        %877 = vmatpush1.msra.mxu0 0.0
        %878 = vmatprep.subr.mxu0 0.0
        %879 = vmatpush1.msra.mxu0 0.0
        %880 = vmatprep.subr.mxu0 0.0
        %881 = vmatpush1.msra.mxu0 0.0
        %882 = vmatprep.subr.mxu0 0.0
        %883 = vmatpush1.msra.mxu0 0.0
        %884 = vmatprep.subr.mxu0 0.0
        %885 = vmatpush1.msra.mxu0 0.0
        %886 = vmatprep.subr.mxu0 0.0
        %887 = vmatpush1.msra.mxu0 0.0
        %888 = vmatprep.subr.mxu0 0.0
        %889 = vmatpush1.msra.mxu0 0.0
        %890 = vmatprep.subr.mxu0 0.0
        %891 = vmatpush1.msra.mxu0 0.0
        %892 = vmatprep.subr.mxu0 0.0
        %893 = vmatpush1.msra.mxu0 0.0
        %894 = vmatprep.subr.mxu0 0.0
        %895 = vmatpush1.msra.mxu0 0.0
        %896 = vmatprep.subr.mxu0 0.0
        %897 = vmatpush1.msra.mxu0 0.0
        %898 = vmatprep.subr.mxu0 0.0
        %899 = vmatpush1.msra.mxu0 0.0
        %900 = vmatprep.subr.mxu0 0.0
        %901 = vmatpush1.msra.mxu0 0.0
        %902 = vmatprep.subr.mxu0 0.0
        %903 = vmatpush1.msra.mxu0 0.0
        %904 = vmatprep.subr.mxu0 0.0
        %905 = vmatpush1.msra.mxu0 0.0
        %906 = vmatprep.subr.mxu0 0.0
        %907 = vmatpush1.msra.mxu0 0.0
        %908 = vmatprep.subr.mxu0 0.0
        %909 = vmatpush1.msra.mxu0 0.0
        %910 = vmatprep.subr.mxu0 0.0
        %911 = vmatpush1.msra.mxu0 0.0
        %912 = vmatprep.subr.mxu0 0.0
        %913 = vmatpush1.msra.mxu0 0.0
        %914 = vmatprep.subr.mxu0 0.0
        %915 = vmatpush1.msra.mxu0 0.0
        %916 = vmatprep.subr.mxu0 0.0
        %917 = vmatpush1.msra.mxu0 0.0
        %918 = vmatprep.subr.mxu0 0.0
        %919 = vmatpush1.msra.mxu0 0.0
        %920 = vmatprep.subr.mxu0 0.0
        %921 = vmatpush1.msra.mxu0 0.0
        %922 = vmatprep.subr.mxu0 0.0
        %923 = vmatpush1.msra.mxu0 0.0
        %924 = vmatprep.subr.mxu0 0.0
        %925 = vmatpush1.msra.mxu0 0.0
        %926 = vmatprep.subr.mxu0 0.0
        %927 = vmatpush1.msra.mxu0 0.0
        %928 = vmatprep.subr.mxu0 0.0
        %929 = vmatpush1.msra.mxu0 0.0
        %930 = vmatprep.subr.mxu0 0.0
        %931 = vmatpush1.msra.mxu0 0.0
        %932 = vmatprep.subr.mxu0 0.0
        %933 = vmatpush1.msra.mxu0 0.0
        %934 = vmatprep.subr.mxu0 0.0
        %935 = vmatpush1.msra.mxu0 0.0
        %936 = vmatprep.mubr.f32.mxu0 0.0
        %937 = vmatmul.mubr.f32.gmra.mrb[0].mxu0 %v870
        %v938 = vpop.f32.mrb[0].mxu0
        %v939 = vadd.f32 %v867, %v938
        %v940 = vpop.f32.mrb[0].mxu0
        %941 = vdwg.mxu0
        %942 = vst [vmem:[%s344] sm:$0x1] %v939
        %p943 = scmp.lt.s32.totalorder %s21, 2
        %s944 = scalar_select %p943, %s21, 2
        %s945 = scalar_lea.vmem %s9, %s944
        // Predicated region
        $region61: #{diabetes_network_forward.1} parent=55 // pred_check
          %p946 = pneg %p233
        $region62: #{diabetes_network_forward.1} parent=55 // pred_check_branch
          %948 = sbr.rel (%p946) target = $region64
        $region63: #{diabetes_network_forward.1} parent=55 // pred_region
          _
        $region64: #{diabetes_network_forward.1} parent=55 // pred_fallthru
          _
      $region56: #{diabetes_network_forward.1} parent=5 // pred_fallthru
        _
      %p949 = scmp.le.s32.totalorder 2, %s16
      // Predicated region
      $region65: #{diabetes_network_forward.1} parent=5 // pred_check
        %p950 = pneg %p949
      $region66: #{diabetes_network_forward.1} parent=5 // pred_check_branch
        %952 = sbr.rel (%p950) target = $region68
      $region67: #{diabetes_network_forward.1} parent=5 // pred_region
        %s953 = ssub.s32 %s16, 2
        // Predicated region
        $region69: #{diabetes_network_forward.1} parent=67 // pred_check
          %p954 = pneg %p239
        $region70: #{diabetes_network_forward.1} parent=67 // pred_check_branch
          %956 = sbr.rel (%p954) target = $region72
        $region71: #{diabetes_network_forward.1} parent=67 // pred_region
          %p957 = scmp.lt.s32.totalorder %s22, 2
          %s958 = scalar_select %p957, %s22, 2
          %s959 = scalar_lea.vmem %s9, %s958
        $region72: #{diabetes_network_forward.1} parent=67 // pred_fallthru
          _
      $region68: #{diabetes_network_forward.1} parent=5 // pred_fallthru
        _
    $region6: #{diabetes_network_forward.1} parent=1 // loop_footer
      %s20 = sadd.s32 1, %s16
    $region7: #{diabetes_network_forward.1} parent=1 // loop_footer_branch
      %15 = sbr.rel target = $region3
    $region8: #{diabetes_network_forward.1} parent=1 // loop_exit
      _
    %960 = vsyncpa [#allocation3], 1
    %s961 = scalar_lea.sflag [#allocation3], 1
    %962 = vsyncpa %s961, 1

</llo_original>
